<compile_context>
chip_gen: v7x
topology: tpu7x:2x2x1
jax: 0.10.0
libtpu: 0.0.40
codegen_flags: <defaults>
</compile_context>

<pallas_src>
import math
import functools

import jax
import jax.numpy as jnp
from jax.experimental import pallas as pl
from jax.experimental.pallas import tpu as pltpu


_LANE = 128
_SUBLANE = 8


def _round_up(n, m):
    return ((n + m - 1) // m) * m


# ----------------------------------------------------------------------------
# Fused MLP kernel: one batch tile, all layers computed in VMEM/registers.
# refs = (x_ref, w0, b0, w1, b1, ..., o_ref)
# ----------------------------------------------------------------------------
def _fused_mlp_kernel(*refs, acts, true_dims):
    n_layers = len(acts)
    x_ref = refs[0]
    o_ref = refs[1 + 2 * n_layers]

    h = x_ref[...]                                    # bf16 (tm, Din_pad)
    for i, act in enumerate(acts):
        w = refs[1 + 2 * i][...]                      # bf16 (Din_pad, Dout_pad)
        b = refs[2 + 2 * i][...]                      # f32  (1, Dout_pad)
        # bf16 MXU matmul, f32 accumulate; bias folded into the f32 epilogue.
        y = jnp.dot(h, w, preferred_element_type=jnp.float32) + b

        if act == "gelu":
            # exact (erf-based) GELU, matching torch.nn.GELU() default.
            y = 0.5 * y * (1.0 + jax.lax.erf(y * (1.0 / math.sqrt(2.0))))
        elif act == "sigmoid":
            y = jax.nn.sigmoid(y)
        elif act == "softmax":
            d_true = true_dims[i]
            d_pad = y.shape[-1]
            if d_pad != d_true:
                # Mask padded lanes so they do not perturb the softmax sum.
                col = jax.lax.broadcasted_iota(jnp.int32, y.shape, 1)
                y = jnp.where(col < d_true, y, -1e30)
            y = y - jnp.max(y, axis=-1, keepdims=True)
            e = jnp.exp(y)
            y = e * pl.reciprocal(jnp.sum(e, axis=-1, keepdims=True), approx=True)
        else:
            raise ValueError(f"unsupported activation: {act}")

        if i + 1 < n_layers:
            h = y.astype(jnp.bfloat16)                # next MXU matmul in bf16
        else:
            o_ref[...] = y.astype(o_ref.dtype)
    # NOTE: nn.Dropout after the first block is identity at inference time.
    # TODO(synk): training-mode dropout is not implemented.


# ----------------------------------------------------------------------------
# Host wrapper: pad/cast inputs, pick a batch tile, build the fused call.
# ----------------------------------------------------------------------------
def fused_mlp_forward(x, padded_ws, padded_bs, acts, true_out_dims):
    B, Din = x.shape
    n_layers = len(padded_ws)
    dpads = [padded_ws[0].shape[0]] + [w.shape[1] for w in padded_ws]
    out_dtype = x.dtype
    out_itemsize = jnp.dtype(out_dtype).itemsize

    # ---- batch tiling (fit double-buffered footprint in a 32 MiB budget) ----
    B8 = _round_up(max(B, 1), _SUBLANE)
    tm = min(512, B8)

    def vmem_bytes(tm_):
        nbytes = 2 * tm_ * dpads[0] * 2                       # x tiles (bf16)
        nbytes += 2 * tm_ * dpads[-1] * out_itemsize          # out tiles
        for i in range(n_layers):                             # resident params
            nbytes += 2 * (dpads[i] * dpads[i + 1] * 2 + dpads[i + 1] * 4)
        nbytes += 2 * tm_ * max(dpads) * 4                    # live intermediates
        return nbytes

    while tm > _SUBLANE and vmem_bytes(tm) > (32 << 20):
        tm //= 2
    B_pad = _round_up(B8, tm)

    # ---- pad & cast the activations (zeros in padded rows/lanes) ----
    x_p = jnp.zeros((B_pad, dpads[0]), jnp.bfloat16)
    x_p = x_p.at[:B, :Din].set(x.astype(jnp.bfloat16))

    grid = (B_pad // tm,)

    in_specs = [pl.BlockSpec((tm, dpads[0]), lambda i: (i, 0))]
    for li in range(n_layers):
        # Same block index every grid step -> weights/biases stay VMEM-resident.
        in_specs.append(pl.BlockSpec((dpads[li], dpads[li + 1]), lambda i: (0, 0)))
        in_specs.append(pl.BlockSpec((1, dpads[li + 1]), lambda i: (0, 0)))
    out_specs = pl.BlockSpec((tm, dpads[-1]), lambda i: (i, 0))

    flops = sum(2 * B_pad * dpads[i] * dpads[i + 1] for i in range(n_layers))
    transcendentals = sum(B_pad * dpads[i + 1] for i in range(n_layers))
    bytes_accessed = (x_p.size * 2
                      + sum(int(w.size) * 2 for w in padded_ws)
                      + sum(int(b.size) * 4 for b in padded_bs)
                      + B_pad * dpads[-1] * out_itemsize)

    kernel = functools.partial(_fused_mlp_kernel,
                               acts=tuple(acts),
                               true_dims=tuple(true_out_dims))

    y_pad = pl.pallas_call(
        kernel,
        out_shape=jax.ShapeDtypeStruct((B_pad, dpads[-1]), out_dtype),
        grid=grid,
        in_specs=in_specs,
        out_specs=out_specs,
        compiler_params=pltpu.CompilerParams(
            dimension_semantics=("parallel",),
            vmem_limit_bytes=int(min(max(2 * vmem_bytes(tm), 4 << 20), 48 << 20)),
        ),
        cost_estimate=pl.CostEstimate(
            flops=int(flops),
            transcendentals=int(transcendentals),
            bytes_accessed=int(bytes_accessed),
        ),
    )(x_p, *[p for wb in zip(padded_ws, padded_bs) for p in wb])

    return y_pad[:B, :true_out_dims[-1]]


# ----------------------------------------------------------------------------
# Encoder: mirrors create_layer_list / nn.Sequential semantics (eval mode).
# ----------------------------------------------------------------------------
class Encoder:
    def __init__(self, dim_list, act_list, dropout=0.5, key=None):
        assert len(act_list) == len(dim_list) - 1
        for a in act_list:
            assert a in ("gelu", "sigmoid", "softmax")
        self.act_list = list(act_list)
        self.dim_list = list(dim_list)
        self.dropout = dropout  # identity at inference
        # TODO(synk): training-mode dropout (after the first block) is not
        # implemented; inference semantics (identity) are used.

        if key is None:
            key = jax.random.PRNGKey(0)

        dpads = [max(_LANE, _round_up(d, _LANE)) for d in dim_list]
        self.dpads = dpads
        self.params = []      # unpadded f32 (used by the pure-JAX reference)
        self.padded_ws = []   # bf16, feature dims zero-padded to 128 lanes
        self.padded_bs = []   # f32, (1, Dout_pad)

        for i in range(len(dim_list) - 1):
            fan_in, fan_out = dim_list[i], dim_list[i + 1]
            key, kw, kb = jax.random.split(key, 3)
            # deterministic init mimicking nn.Linear's uniform(-1/sqrt(fan_in), ..)
            bound = 1.0 / math.sqrt(fan_in)
            w = jax.random.uniform(kw, (fan_in, fan_out), jnp.float32,
                                   minval=-bound, maxval=bound)
            b = jax.random.uniform(kb, (fan_out,), jnp.float32,
                                   minval=-bound, maxval=bound)
            self.params.append((w, b))

            w_p = jnp.zeros((dpads[i], dpads[i + 1]), jnp.bfloat16)
            w_p = w_p.at[:fan_in, :fan_out].set(w.astype(jnp.bfloat16))
            b_p = jnp.zeros((1, dpads[i + 1]), jnp.float32)
            b_p = b_p.at[0, :fan_out].set(b)
            self.padded_ws.append(w_p)
            self.padded_bs.append(b_p)

    def __call__(self, x):
        return fused_mlp_forward(x, self.padded_ws, self.padded_bs,
                                 self.act_list, self.dim_list[1:])


# ----------------------------------------------------------------------------
# Pure-JAX reference with the kernel's numerics (bf16 MXU operands, f32 acc).
# ----------------------------------------------------------------------------
def reference_forward(enc, x):
    h = x.astype(jnp.bfloat16)
    n = len(enc.params)
    for i, ((w, b), act) in enumerate(zip(enc.params, enc.act_list)):
        y = jnp.dot(h, w.astype(jnp.bfloat16),
                    preferred_element_type=jnp.float32) + b
        if act == "gelu":
            y = 0.5 * y * (1.0 + jax.lax.erf(y / math.sqrt(2.0)))
        elif act == "sigmoid":
            y = jax.nn.sigmoid(y)
        elif act == "softmax":
            y = jax.nn.softmax(y, axis=-1)
        h = y.astype(jnp.bfloat16) if i + 1 < n else y
    return h.astype(x.dtype)


if __name__ == "__main__":
    key = jax.random.PRNGKey(0)
    k_x, k_p1, k_p2 = jax.random.split(key, 3)

    # small shapes consistent with the module: dim_list defines the MLP widths
    dim_list = [32, 64, 16]
    batch = 8
    x = jax.random.normal(k_x, (batch, dim_list[0]), jnp.float32)

    # case 1: gelu + sigmoid
    enc1 = Encoder(dim_list, ["gelu", "sigmoid"], dropout=0.5, key=k_p1)
    out1 = jax.block_until_ready(enc1(x))
    ref1 = reference_forward(enc1, x)
    assert out1.shape == (batch, dim_list[-1])
    assert jnp.allclose(out1, ref1, atol=2e-2, rtol=2e-2), "mismatch (gelu/sigmoid)"

    # case 2: gelu + softmax (exercises padded-lane masking + approx reciprocal)
    enc2 = Encoder(dim_list, ["gelu", "softmax"], dropout=0.5, key=k_p2)
    out2 = jax.block_until_ready(enc2(x))
    ref2 = reference_forward(enc2, x)
    assert out2.shape == (batch, dim_list[-1])
    assert jnp.allclose(out2, ref2, atol=2e-2, rtol=2e-2), "mismatch (gelu/softmax)"
    assert jnp.allclose(jnp.sum(out2, axis=-1), 1.0, atol=1e-2), "softmax rows != 1"

    print("KERNEL_OK")
</pallas_src>

<mosaic_0001>
module attributes {stable_mosaic.version = 11 : i64} {
  func.func @_fused_mlp_kernel(%arg0: i32, %arg1: memref<8x128xbf16, #tpu.memory_space<vmem>>, %arg2: memref<128x128xbf16, #tpu.memory_space<vmem>>, %arg3: memref<1x128xf32, #tpu.memory_space<vmem>>, %arg4: memref<128x128xbf16, #tpu.memory_space<vmem>>, %arg5: memref<1x128xf32, #tpu.memory_space<vmem>>, %arg6: memref<8x128xf32, #tpu.memory_space<vmem>>) attributes {dimension_semantics = [#tpu.dimension_semantics<parallel>], iteration_bounds = array<i64: 1>, scalar_prefetch = 0 : i64, scratch_operands = 0 : i64, tpu.core_type = #tpu.core_type<tc>, window_params = [{transform_indices = @transform_0, window_bounds = array<i64: 8, 128>}, {pipeline_mode = #tpu.pipeline_mode<synchronous>, transform_indices = @transform_1, window_bounds = array<i64: 128, 128>}, {pipeline_mode = #tpu.pipeline_mode<synchronous>, transform_indices = @transform_2, window_bounds = array<i64: 1, 128>}, {pipeline_mode = #tpu.pipeline_mode<synchronous>, transform_indices = @transform_3, window_bounds = array<i64: 128, 128>}, {pipeline_mode = #tpu.pipeline_mode<synchronous>, transform_indices = @transform_4, window_bounds = array<i64: 1, 128>}, {transform_indices = @transform_5, window_bounds = array<i64: 8, 128>}]} {
    %c0 = arith.constant 0 : index
    %c0_0 = arith.constant 0 : index
    %0 = vector.load %arg1[%c0, %c0_0] : memref<8x128xbf16, #tpu.memory_space<vmem>>, vector<8x128xbf16>
    %c0_1 = arith.constant 0 : index
    %c0_2 = arith.constant 0 : index
    %1 = vector.load %arg2[%c0_1, %c0_2] : memref<128x128xbf16, #tpu.memory_space<vmem>>, vector<128x128xbf16>
    %c0_3 = arith.constant 0 : index
    %c0_4 = arith.constant 0 : index
    %2 = vector.load %arg3[%c0_3, %c0_4] : memref<1x128xf32, #tpu.memory_space<vmem>>, vector<1x128xf32>
    %cst = arith.constant dense<0.000000e+00> : vector<8x128xf32>
    %3 = tpu.matmul %0, %1, %cst {dimension_numbers = #tpu.dot_dimension_numbers<[1], [0], [0], [1], [0, 0, 1, 1], [], []>} : vector<8x128xbf16>, vector<128x128xbf16>, vector<8x128xf32> -> vector<8x128xf32>
    %4 = vector.broadcast %2 : vector<1x128xf32> to vector<8x128xf32>
    %5 = arith.addf %3, %4 : vector<8x128xf32>
    %cst_5 = arith.constant 5.000000e-01 : f32
    %6 = vector.broadcast %cst_5 : f32 to vector<8x128xf32>
    %7 = arith.mulf %6, %5 : vector<8x128xf32>
    %cst_6 = arith.constant 0.707106769 : f32
    %8 = vector.broadcast %cst_6 : f32 to vector<8x128xf32>
    %9 = arith.mulf %5, %8 : vector<8x128xf32>
    %10 = math.erf %9 : vector<8x128xf32>
    %cst_7 = arith.constant 1.000000e+00 : f32
    %11 = vector.broadcast %cst_7 : f32 to vector<8x128xf32>
    %12 = arith.addf %11, %10 : vector<8x128xf32>
    %13 = arith.mulf %7, %12 : vector<8x128xf32>
    %14 = arith.truncf %13 : vector<8x128xf32> to vector<8x128xbf16>
    %c0_8 = arith.constant 0 : index
    %c0_9 = arith.constant 0 : index
    %15 = vector.load %arg4[%c0_8, %c0_9] : memref<128x128xbf16, #tpu.memory_space<vmem>>, vector<128x128xbf16>
    %c0_10 = arith.constant 0 : index
    %c0_11 = arith.constant 0 : index
    %16 = vector.load %arg5[%c0_10, %c0_11] : memref<1x128xf32, #tpu.memory_space<vmem>>, vector<1x128xf32>
    %cst_12 = arith.constant dense<0.000000e+00> : vector<8x128xf32>
    %17 = tpu.matmul %14, %15, %cst_12 {dimension_numbers = #tpu.dot_dimension_numbers<[1], [0], [0], [1], [0, 0, 1, 1], [], []>} : vector<8x128xbf16>, vector<128x128xbf16>, vector<8x128xf32> -> vector<8x128xf32>
    %18 = vector.broadcast %16 : vector<1x128xf32> to vector<8x128xf32>
    %19 = arith.addf %17, %18 : vector<8x128xf32>
    %20 = arith.negf %19 : vector<8x128xf32>
    %21 = math.exp %20 : vector<8x128xf32>
    %cst_13 = arith.constant 1.000000e+00 : f32
    %22 = vector.broadcast %cst_13 : f32 to vector<8x128xf32>
    %23 = arith.addf %22, %21 : vector<8x128xf32>
    %24 = arith.divf %22, %23 : vector<8x128xf32>
    %c0_14 = arith.constant 0 : index
    %c0_15 = arith.constant 0 : index
    %25 = vector.load %arg6[%c0_14, %c0_15] : memref<8x128xf32, #tpu.memory_space<vmem>>, vector<8x128xf32>
    tpu.vector_store %arg6[%c0_14, %c0_15], %24 {strides = array<i32>} : memref<8x128xf32, #tpu.memory_space<vmem>>, vector<8x128xf32>,
    return
  }
  func.func @transform_0(%arg0: i32) -> (i32, i32) {
    %c0_i32 = arith.constant 0 : i32
    %c0_i32_0 = arith.constant 0 : i32
    return %arg0, %c0_i32 : i32, i32
  }
  func.func @transform_1(%arg0: i32) -> (i32, i32) {
    %c0_i32 = arith.constant 0 : i32
    %c0_i32_0 = arith.constant 0 : i32
    %c0_i32_1 = arith.constant 0 : i32
    return %c0_i32, %c0_i32_0 : i32, i32
  }
  func.func @transform_2(%arg0: i32) -> (i32, i32) {
    %c0_i32 = arith.constant 0 : i32
    %c0_i32_0 = arith.constant 0 : i32
    %c0_i32_1 = arith.constant 0 : i32
    return %c0_i32, %c0_i32_0 : i32, i32
  }
  func.func @transform_3(%arg0: i32) -> (i32, i32) {
    %c0_i32 = arith.constant 0 : i32
    %c0_i32_0 = arith.constant 0 : i32
    %c0_i32_1 = arith.constant 0 : i32
    return %c0_i32, %c0_i32_0 : i32, i32
  }
  func.func @transform_4(%arg0: i32) -> (i32, i32) {
    %c0_i32 = arith.constant 0 : i32
    %c0_i32_0 = arith.constant 0 : i32
    %c0_i32_1 = arith.constant 0 : i32
    return %c0_i32, %c0_i32_0 : i32, i32
  }
  func.func @transform_5(%arg0: i32) -> (i32, i32) {
    %c0_i32 = arith.constant 0 : i32
    %c0_i32_0 = arith.constant 0 : i32
    return %arg0, %c0_i32 : i32, i32
  }
}

</mosaic_0001>

<llo_original>
// kernel: tpu_custom_call.1
$region0: #{tpu_custom_call.1}
  #allocation0 [shape = 'u32[]', space=smem, size = 0x4, offset = 0x4, fixed_abs, tag = 'smem constant byte address 0x4 - core index']
  #allocation1 [shape = 'u32[144,128]{1,0:T(1,128)}', space=vmem, size = 0x12000, scoped, tag = 'internal scratch']
  %s0 = inlined_call_operand.hbm [shape: bf16[8,128], index: 0, kind: input, shape index: {}]
  %s1 = inlined_call_operand.hbm [shape: bf16[128,128], index: 1, kind: input, shape index: {}]
  %s2 = inlined_call_operand.vmem [shape: f32[1,128], index: 2, kind: input, shape index: {}]
  %s3 = inlined_call_operand.hbm [shape: bf16[128,128], index: 3, kind: input, shape index: {}]
  %s4 = inlined_call_operand.vmem [shape: f32[1,128], index: 4, kind: input, shape index: {}]
  %s5 = inlined_call_operand.hbm [shape: f32[8,128], index: 5, kind: output, shape index: {}]
  %s6 = sld [smem:[#allocation0]]
  $region42: #{tpu_custom_call.1} parent=0
    _
  %s8 = ssub.s32 1, %s6
  %s9 = scalar_select 0, %s8, %s6
  $region1: #{tpu_custom_call.1} parent=0
    #allocation2 [shape = 'u8[2048]{0}', space=vmem, size = 0x800, scoped, tag = 'input window, operand 0, single buffered']
    #allocation3 [shape = 's32[1]{0}', space=sflag, size = 0x4, scoped, tag = 'scoped memory for tpu_custom_call.1']
    #allocation4 [shape = 's32[1]{0}', space=sflag, size = 0x4, scoped, tag = 'scoped memory for tpu_custom_call.1']
    #allocation5 [shape = 'u8[32768]{0}', space=vmem, size = 0x8000, scoped, tag = 'input window, operand 1, single buffered']
    #allocation6 [shape = 's32[1]{0}', space=sflag, size = 0x4, scoped, tag = 'scoped memory for tpu_custom_call.1']
    #allocation7 [shape = 'u8[32768]{0}', space=vmem, size = 0x8000, scoped, tag = 'input window, operand 3, single buffered']
    #allocation8 [shape = 'u8[4096]{0}', space=vmem, size = 0x1000, scoped, tag = 'output window, operand 0, single buffered']
    %10 = vsyncpa [#allocation3], 0
    %11 = vsyncpa [#allocation6], 0
    %12 = vsyncpa [#allocation4], 0
    // Predicated region
    $region2: #{tpu_custom_call.1} parent=1 // pred_check
      _
    $region3: #{tpu_custom_call.1} parent=1 // pred_check_branch
      %14 = sbr.rel (0) target = $region5
    $region4: #{tpu_custom_call.1} parent=1 // pred_region
      %s16 = ssub.s32 64, 64
      %17 = vsyncadd [#allocation3], %s16
      %s19 = sshll.u32 [#allocation2], 4
      %s20 = int_to_ptr.vmem [resolvable:$true] %s19
      %22 = dma.hbm_to_vmem [thread:$0]  %s0, 64, %s20, [#allocation3]
    $region5: #{tpu_custom_call.1} parent=1 // pred_fallthru
      _
    // Predicated region
    $region6: #{tpu_custom_call.1} parent=1 // pred_check
      _
    $region7: #{tpu_custom_call.1} parent=1 // pred_check_branch
      %24 = sbr.rel (0) target = $region9
    $region8: #{tpu_custom_call.1} parent=1 // pred_region
      %s26 = ssub.s32 1024, 1024
      %27 = vsyncadd [#allocation6], %s26
      %s28 = sshll.u32 [#allocation5], 4
      %s29 = int_to_ptr.vmem [resolvable:$true] %s28
      %34 = dma.hbm_to_vmem [thread:$0]  %s1, 1024, %s29, [#allocation6], 64, 64, 4
    $region9: #{tpu_custom_call.1} parent=1 // pred_fallthru
      _
    // Predicated region
    $region10: #{tpu_custom_call.1} parent=1 // pred_check
      _
    $region11: #{tpu_custom_call.1} parent=1 // pred_check_branch
      %36 = sbr.rel (0) target = $region13
    $region12: #{tpu_custom_call.1} parent=1 // pred_region
      _
    $region13: #{tpu_custom_call.1} parent=1 // pred_fallthru
      _
    // Predicated region
    $region14: #{tpu_custom_call.1} parent=1 // pred_check
      _
    $region15: #{tpu_custom_call.1} parent=1 // pred_check_branch
      %38 = sbr.rel (0) target = $region17
    $region16: #{tpu_custom_call.1} parent=1 // pred_region
      %s40 = ssub.s32 1024, 1024
      %41 = vsyncadd [#allocation6], %s40
      %s42 = sshll.u32 [#allocation7], 4
      %s43 = int_to_ptr.vmem [resolvable:$true] %s42
      %48 = dma.hbm_to_vmem [thread:$0]  %s3, 1024, %s43, [#allocation6], 64, 64, 4
    $region17: #{tpu_custom_call.1} parent=1 // pred_fallthru
      _
    // Predicated region
    $region18: #{tpu_custom_call.1} parent=1 // pred_check
      _
    $region19: #{tpu_custom_call.1} parent=1 // pred_check_branch
      %50 = sbr.rel (0) target = $region21
    $region20: #{tpu_custom_call.1} parent=1 // pred_region
      _
    $region21: #{tpu_custom_call.1} parent=1 // pred_fallthru
      _
    // Predicated region
    $region22: #{tpu_custom_call.1} parent=1 // pred_check
      _
    $region23: #{tpu_custom_call.1} parent=1 // pred_check_branch
      %52 = sbr.rel (0) target = $region25
    $region24: #{tpu_custom_call.1} parent=1 // pred_region
      %53 = dma.done [#allocation3], 64
    $region25: #{tpu_custom_call.1} parent=1 // pred_fallthru
      _
    // Predicated region
    $region26: #{tpu_custom_call.1} parent=1 // pred_check
      _
    $region27: #{tpu_custom_call.1} parent=1 // pred_check_branch
      %55 = sbr.rel (0) target = $region29
    $region28: #{tpu_custom_call.1} parent=1 // pred_region
      %56 = dma.done [#allocation6], 1024
    $region29: #{tpu_custom_call.1} parent=1 // pred_fallthru
      _
    // Predicated region
    $region30: #{tpu_custom_call.1} parent=1 // pred_check
      _
    $region31: #{tpu_custom_call.1} parent=1 // pred_check_branch
      %58 = sbr.rel (0) target = $region33
    $region32: #{tpu_custom_call.1} parent=1 // pred_region
      %59 = dma.done [#allocation6], 1024
    $region33: #{tpu_custom_call.1} parent=1 // pred_fallthru
      _
    %v61 = vld [vmem:[#allocation2] sm:$0xf]
    %v62 = vld [vmem:[#allocation5] sm:$0xf]
    %v63 = vld [vmem:[#allocation5 + $0x4] sm:$0xf]
    %v64 = vld [vmem:[#allocation5 + $0x8] sm:$0xf]
    %v65 = vld [vmem:[#allocation5 + $0xc] sm:$0xf]
    %v66 = vld [vmem:[#allocation5 + $0x10] sm:$0xf]
    %v67 = vld [vmem:[#allocation5 + $0x14] sm:$0xf]
    %v68 = vld [vmem:[#allocation5 + $0x18] sm:$0xf]
    %v69 = vld [vmem:[#allocation5 + $0x1c] sm:$0xf]
    %v70 = vld [vmem:[#allocation5 + $0x20] sm:$0xf]
    %v71 = vld [vmem:[#allocation5 + $0x24] sm:$0xf]
    %v72 = vld [vmem:[#allocation5 + $0x28] sm:$0xf]
    %v73 = vld [vmem:[#allocation5 + $0x2c] sm:$0xf]
    %v74 = vld [vmem:[#allocation5 + $0x30] sm:$0xf]
    %v75 = vld [vmem:[#allocation5 + $0x34] sm:$0xf]
    %v76 = vld [vmem:[#allocation5 + $0x38] sm:$0xf]
    %v77 = vld [vmem:[#allocation5 + $0x3c] sm:$0xf]
    %v78 = vld [vmem:[%s2] sm:$0x1]
    %v80 = vlaneseq
    %v81 = vshrl.u32 %v80, 7
    %v82 = vsub.s32 0, %v81
    %v83 = vrot.slane %v78, %v82
    %v101 = vunpack.c.l.b16 %v62
    %v102 = vunpack.c.l.b16 %v63
    %v103 = vunpack.c.l.b16 %v64
    %v104 = vunpack.c.l.b16 %v65
    %v105 = vunpack.c.l.b16 %v66
    %v106 = vunpack.c.l.b16 %v67
    %v107 = vunpack.c.l.b16 %v68
    %v108 = vunpack.c.l.b16 %v69
    %v109 = vunpack.c.l.b16 %v70
    %v110 = vunpack.c.l.b16 %v71
    %v111 = vunpack.c.l.b16 %v72
    %v112 = vunpack.c.l.b16 %v73
    %v113 = vunpack.c.l.b16 %v74
    %v114 = vunpack.c.l.b16 %v75
    %v115 = vunpack.c.l.b16 %v76
    %v116 = vunpack.c.l.b16 %v77
    %v117 = vpack.c.b16 %v102, %v101
    %v118 = vpack.c.b16 %v104, %v103
    %v119 = vpack.c.b16 %v106, %v105
    %v120 = vpack.c.b16 %v108, %v107
    %v121 = vpack.c.b16 %v110, %v109
    %v122 = vpack.c.b16 %v112, %v111
    %v123 = vpack.c.b16 %v114, %v113
    %v124 = vpack.c.b16 %v116, %v115
    %133 = vmatprep.subr.bf16.mxu0 0
    %134 = vmatpush1.bf16.msra.mxu0 %v117
    %135 = vmatprep.subr.bf16.mxu0 0
    %136 = vmatpush1.bf16.msra.mxu0 %v118
    %137 = vmatprep.subr.bf16.mxu0 0
    %138 = vmatpush1.bf16.msra.mxu0 %v119
    %139 = vmatprep.subr.bf16.mxu0 0
    %140 = vmatpush1.bf16.msra.mxu0 %v120
    %141 = vmatprep.subr.bf16.mxu0 0
    %142 = vmatpush1.bf16.msra.mxu0 %v121
    %143 = vmatprep.subr.bf16.mxu0 0
    %144 = vmatpush1.bf16.msra.mxu0 %v122
    %145 = vmatprep.subr.bf16.mxu0 0
    %146 = vmatpush1.bf16.msra.mxu0 %v123
    %147 = vmatprep.subr.bf16.mxu0 0
    %148 = vmatpush1.bf16.msra.mxu0 %v124
    %149 = vmatprep.subr.bf16.mxu0 0
    %150 = vmatpush1.bf16.msra.mxu0 0
    %151 = vmatprep.subr.bf16.mxu0 0
    %152 = vmatpush1.bf16.msra.mxu0 0
    %153 = vmatprep.subr.bf16.mxu0 0
    %154 = vmatpush1.bf16.msra.mxu0 0
    %155 = vmatprep.subr.bf16.mxu0 0
    %156 = vmatpush1.bf16.msra.mxu0 0
    %157 = vmatprep.subr.bf16.mxu0 0
    %158 = vmatpush1.bf16.msra.mxu0 0
    %159 = vmatprep.subr.bf16.mxu0 0
    %160 = vmatpush1.bf16.msra.mxu0 0
    %161 = vmatprep.subr.bf16.mxu0 0
    %162 = vmatpush1.bf16.msra.mxu0 0
    %163 = vmatprep.subr.bf16.mxu0 0
    %164 = vmatpush1.bf16.msra.mxu0 0
    %165 = vmatprep.mubr.bf16.mxu0 0
    %166 = vmatmul.mubr.bf16.gmra.mrb[0].mxu0 %v61
    %v167 = vpop.f32.mrb[0].mxu0
    %v168 = vadd.f32 %v83, %v167
    %v169 = vpop.f32.mrb[0].mxu0
    %v170 = vpop.f32.mrb[0].mxu0
    %v171 = vpop.f32.mrb[0].mxu0
    %172 = vdwg.mxu0
    %v173 = vmul.f32 %v168, 0.5
    %v174 = vmul.f32 %v168, 0.70710677
    %v175 = verf.f32.pop %v174
    %v176 = vadd.f32 %v175, 1.0
    %v177 = vmul.f32 %v173, %v176
    %v178 = vpack.c.bf16 %v177, %v177
    %v179 = vld [vmem:[#allocation7] sm:$0xf]
    %v180 = vld [vmem:[#allocation7 + $0x4] sm:$0xf]
    %v181 = vld [vmem:[#allocation7 + $0x8] sm:$0xf]
    %v182 = vld [vmem:[#allocation7 + $0xc] sm:$0xf]
    %v183 = vld [vmem:[#allocation7 + $0x10] sm:$0xf]
    %v184 = vld [vmem:[#allocation7 + $0x14] sm:$0xf]
    %v185 = vld [vmem:[#allocation7 + $0x18] sm:$0xf]
    %v186 = vld [vmem:[#allocation7 + $0x1c] sm:$0xf]
    %v187 = vld [vmem:[#allocation7 + $0x20] sm:$0xf]
    %v188 = vld [vmem:[#allocation7 + $0x24] sm:$0xf]
    %v189 = vld [vmem:[#allocation7 + $0x28] sm:$0xf]
    %v190 = vld [vmem:[#allocation7 + $0x2c] sm:$0xf]
    %v191 = vld [vmem:[#allocation7 + $0x30] sm:$0xf]
    %v192 = vld [vmem:[#allocation7 + $0x34] sm:$0xf]
    %v193 = vld [vmem:[#allocation7 + $0x38] sm:$0xf]
    %v194 = vld [vmem:[#allocation7 + $0x3c] sm:$0xf]
    %v195 = vld [vmem:[%s4] sm:$0x1]
    %v197 = vlaneseq
    %v198 = vshrl.u32 %v197, 7
    %v199 = vsub.s32 0, %v198
    %v200 = vrot.slane %v195, %v199
    %v218 = vunpack.c.l.b16 %v179
    %v219 = vunpack.c.l.b16 %v180
    %v220 = vunpack.c.l.b16 %v181
    %v221 = vunpack.c.l.b16 %v182
    %v222 = vunpack.c.l.b16 %v183
    %v223 = vunpack.c.l.b16 %v184
    %v224 = vunpack.c.l.b16 %v185
    %v225 = vunpack.c.l.b16 %v186
    %v226 = vunpack.c.l.b16 %v187
    %v227 = vunpack.c.l.b16 %v188
    %v228 = vunpack.c.l.b16 %v189
    %v229 = vunpack.c.l.b16 %v190
    %v230 = vunpack.c.l.b16 %v191
    %v231 = vunpack.c.l.b16 %v192
    %v232 = vunpack.c.l.b16 %v193
    %v233 = vunpack.c.l.b16 %v194
    %v234 = vpack.c.b16 %v219, %v218
    %v235 = vpack.c.b16 %v221, %v220
    %v236 = vpack.c.b16 %v223, %v222
    %v237 = vpack.c.b16 %v225, %v224
    %v238 = vpack.c.b16 %v227, %v226
    %v239 = vpack.c.b16 %v229, %v228
    %v240 = vpack.c.b16 %v231, %v230
    %v241 = vpack.c.b16 %v233, %v232
    %250 = vmatprep.subr.bf16.mxu0 0
    %251 = vmatpush1.bf16.msra.mxu0 %v234
    %252 = vmatprep.subr.bf16.mxu0 0
    %253 = vmatpush1.bf16.msra.mxu0 %v235
    %254 = vmatprep.subr.bf16.mxu0 0
    %255 = vmatpush1.bf16.msra.mxu0 %v236
    %256 = vmatprep.subr.bf16.mxu0 0
    %257 = vmatpush1.bf16.msra.mxu0 %v237
    %258 = vmatprep.subr.bf16.mxu0 0
    %259 = vmatpush1.bf16.msra.mxu0 %v238
    %260 = vmatprep.subr.bf16.mxu0 0
    %261 = vmatpush1.bf16.msra.mxu0 %v239
    %262 = vmatprep.subr.bf16.mxu0 0
    %263 = vmatpush1.bf16.msra.mxu0 %v240
    %264 = vmatprep.subr.bf16.mxu0 0
    %265 = vmatpush1.bf16.msra.mxu0 %v241
    %266 = vmatprep.subr.bf16.mxu0 0
    %267 = vmatpush1.bf16.msra.mxu0 0
    %268 = vmatprep.subr.bf16.mxu0 0
    %269 = vmatpush1.bf16.msra.mxu0 0
    %270 = vmatprep.subr.bf16.mxu0 0
    %271 = vmatpush1.bf16.msra.mxu0 0
    %272 = vmatprep.subr.bf16.mxu0 0
    %273 = vmatpush1.bf16.msra.mxu0 0
    %274 = vmatprep.subr.bf16.mxu0 0
    %275 = vmatpush1.bf16.msra.mxu0 0
    %276 = vmatprep.subr.bf16.mxu0 0
    %277 = vmatpush1.bf16.msra.mxu0 0
    %278 = vmatprep.subr.bf16.mxu0 0
    %279 = vmatpush1.bf16.msra.mxu0 0
    %280 = vmatprep.subr.bf16.mxu0 0
    %281 = vmatpush1.bf16.msra.mxu0 0
    %282 = vmatprep.mubr.bf16.mxu0 0
    %283 = vmatmul.mubr.bf16.gmra.mrb[0].mxu0 %v178
    %v284 = vpop.f32.mrb[0].mxu0
    %v285 = vadd.f32 %v200, %v284
    %v286 = vpop.f32.mrb[0].mxu0
    %v287 = vpop.f32.mrb[0].mxu0
    %v288 = vpop.f32.mrb[0].mxu0
    %289 = vdwg.mxu0
    %v290 = vxor.u32 %v285, 2147483648
    %v291 = vmul.f32 %v290, 1.442695
    %v292 = vpow.pop %v291
    %v293 = vadd.f32 %v292, 1.0
    %v294 = vrcp.pop %v293
    %v295 = vmul.f32 1.0, %v294
    %296 = vst [vmem:[#allocation8] sm:$0xff] %v295
    // Predicated region
    $region34: #{tpu_custom_call.1} parent=1 // pred_check
      _
    $region35: #{tpu_custom_call.1} parent=1 // pred_check_branch
      %298 = sbr.rel (0) target = $region37
    $region36: #{tpu_custom_call.1} parent=1 // pred_region
      %s300 = ssub.s32 128, 128
      %301 = vsyncadd [#allocation4], %s300
      %s303 = sshll.u32 [#allocation8], 4
      %s304 = int_to_ptr.vmem [resolvable:$true] %s303
      %306 = dma.vmem_to_hbm [thread:$0]  %s304, 128, %s5, [#allocation4]
    $region37: #{tpu_custom_call.1} parent=1 // pred_fallthru
      _
    // Predicated region
    $region38: #{tpu_custom_call.1} parent=1 // pred_check
      _
    $region39: #{tpu_custom_call.1} parent=1 // pred_check_branch
      %308 = sbr.rel (0) target = $region41
    $region40: #{tpu_custom_call.1} parent=1 // pred_region
      %309 = dma.done [#allocation4], 128
    $region41: #{tpu_custom_call.1} parent=1 // pred_fallthru
      _
    %310 = vsyncpa [#allocation3], 1
    %311 = vsyncpa [#allocation6], 1
    %312 = vsyncpa [#allocation4], 1

</llo_original>
